<compile_context>
chip_gen: v7x
topology: tpu7x:2x2x1
jax: 0.10.0
libtpu: 0.0.40
codegen_flags: <defaults>
</compile_context>

<pallas_src>
import functools

import jax
import jax.numpy as jnp
from jax.experimental import pallas as pl
from jax.experimental.pallas import tpu as pltpu

_MASK_ARG = -1e30  # exp(_MASK_ARG) underflows to exactly 0 in f32


def _round_up(x, mult):
    return (x + mult - 1) // mult * mult


def _circle_loss_block_kernel(bi_ref, bj_ref,            # scalar-prefetch (SMEM)
                              frow_ref, fcol_ref,        # (blk, d) feats blocks
                              invr_ref, invc_ref,        # (blk, 1) inverse norms
                              lrow_ref, lcol_ref,        # (blk,1)/(1,blk) labels
                              out_ref,                   # (1, 2, 128) partials
                              *, scale, margin, m, blk, use_bf16_matmul):
    t = pl.program_id(0)
    bi = bi_ref[t]
    bj = bj_ref[t]

    # Row/col blocks of the L2-normalized features (inverse norms precomputed).
    frow = frow_ref[...] * invr_ref[...]                      # (blk, d) f32
    fcol = fcol_ref[...] * invc_ref[...]                      # (blk, d) f32
    if use_bf16_matmul:
        # Optional v6e/v7x MXU speedup; off by default (scale=32 in the
        # exponent amplifies bf16 sim error).
        frow = frow.astype(jnp.bfloat16)
        fcol = fcol.astype(jnp.bfloat16)

    # sim = frow @ fcol.T, contraction over the last dim of both operands.
    sim = jax.lax.dot_general(
        frow, fcol, dimension_numbers=(((1,), (1,)), ((), ())),
        preferred_element_type=jnp.float32)                   # (blk, blk)

    # Pair classification mask (same label) via (blk,1) vs (1,blk) broadcast.
    same = lrow_ref[...] == lcol_ref[...]                     # (blk, blk) bool

    # Strict upper triangle + in-bounds mask in global coordinates.
    row_g = jax.lax.broadcasted_iota(jnp.int32, sim.shape, 0) + bi * blk
    col_g = jax.lax.broadcasted_iota(jnp.int32, sim.shape, 1) + bj * blk
    keep = (col_g > row_g) & (col_g < m)     # col<m & col>row  =>  row<m too

    # Single fused exponential per sim element.
    alpha_p = jnp.maximum(-sim + 1.0 + margin, 0.0)
    alpha_n = jnp.maximum(sim + margin, 0.0)
    arg = jnp.where(same,
                    -scale * alpha_p * (sim - (1.0 - margin)),
                    scale * alpha_n * (sim - margin))
    arg = jnp.where(keep, arg, _MASK_ARG)
    e = jnp.exp(arg)                                          # 0 where masked

    pos = jnp.where(same, e, 0.0)
    neg = e - pos                                             # masked -> 0 in both

    # Hierarchical reduction: lanes first, then collapse to a scalar.
    loss_p = jnp.sum(jnp.sum(pos, axis=-1, keepdims=True))
    loss_n = jnp.sum(jnp.sum(neg, axis=-1, keepdims=True))

    # Lane-dense partial output tile: sublane 0 <- loss_p, sublane 1 <- loss_n.
    sub = jax.lax.broadcasted_iota(jnp.int32, (1, 2, 128), 1)
    out_ref[...] = jnp.where(sub == 0, loss_p, loss_n).astype(jnp.float32)


def circle_loss(feats, labels, scale=32.0, margin=0.25, block=512,
                use_bf16_matmul=False):
    """Pallas implementation of CircleLoss(similarity='cos').forward(feats, labels)."""
    m, d = feats.shape
    assert labels.shape[0] == m
    assert block % 128 == 0

    blk = min(block, _round_up(m, 128))      # multiple of 128 (hence of 8)
    m_pad = _round_up(m, blk)
    nb = m_pad // blk

    # Precompute per-row inverse norms once (F.normalize eps = 1e-12 clamp).
    feats32 = feats.astype(jnp.float32)
    inv_norm = 1.0 / jnp.maximum(
        jnp.sqrt(jnp.sum(feats32 * feats32, axis=-1, keepdims=True)), 1e-12)

    # Zero-pad to a whole number of blocks; padded pairs are masked in-kernel.
    pad = m_pad - m
    feats_p = jnp.pad(feats32, ((0, pad), (0, 0)))
    inv_p = jnp.pad(inv_norm, ((0, pad), (0, 0)))
    lab_p = jnp.pad(labels.astype(jnp.int32), (0, pad))
    lab_row = lab_p.reshape(m_pad, 1)
    lab_col = lab_p.reshape(1, m_pad)

    # Upper-triangular block schedule (j >= i): skipped blocks never DMA.
    sched = [(i, j) for i in range(nb) for j in range(i, nb)]
    bi_arr = jnp.array([i for i, _ in sched], dtype=jnp.int32)
    bj_arr = jnp.array([j for _, j in sched], dtype=jnp.int32)
    nt = len(sched)

    kernel = functools.partial(
        _circle_loss_block_kernel, scale=float(scale), margin=float(margin),
        m=m, blk=blk, use_bf16_matmul=use_bf16_matmul)

    grid_spec = pltpu.PrefetchScalarGridSpec(
        num_scalar_prefetch=2,
        grid=(nt,),
        in_specs=[
            pl.BlockSpec((blk, d), lambda t, bi, bj: (bi[t], 0)),   # row feats
            pl.BlockSpec((blk, d), lambda t, bi, bj: (bj[t], 0)),   # col feats
            pl.BlockSpec((blk, 1), lambda t, bi, bj: (bi[t], 0)),   # row 1/||.||
            pl.BlockSpec((blk, 1), lambda t, bi, bj: (bj[t], 0)),   # col 1/||.||
            pl.BlockSpec((blk, 1), lambda t, bi, bj: (bi[t], 0)),   # row labels
            pl.BlockSpec((1, blk), lambda t, bi, bj: (0, bj[t])),   # col labels
        ],
        out_specs=pl.BlockSpec((1, 2, 128), lambda t, bi, bj: (t, 0, 0)),
    )

    partials = pl.pallas_call(
        kernel,
        out_shape=jax.ShapeDtypeStruct((nt, 2, 128), jnp.float32),
        grid_spec=grid_spec,
        compiler_params=pltpu.CompilerParams(
            dimension_semantics=("parallel",),     # per-step independent outputs
            vmem_limit_bytes=48 * 1024 * 1024),    # fits v7x's 64 MiB VMEM too
    )(bi_arr, bj_arr, feats_p, feats_p, inv_p, inv_p, lab_row, lab_col)

    # Tiny O(num_blocks) cross-block reduction + final log in the wrapper.
    # Note: like the PyTorch reference, loss_p * loss_n can overflow f32 for
    # very large batches; a log-space (logsumexp/softplus) variant would be
    # more stable but would change the reference semantics.
    loss_p = jnp.sum(partials[:, 0, 0])
    loss_n = jnp.sum(partials[:, 1, 0])
    return jnp.log(1.0 + loss_p * loss_n)


def circle_loss_ref(feats, labels, scale=32.0, margin=0.25):
    """Pure-JAX reference for sanity checking."""
    m = labels.shape[0]
    fn = feats / jnp.maximum(
        jnp.linalg.norm(feats, axis=-1, keepdims=True), 1e-12)
    sim = fn @ fn.T
    same = (labels[:, None] == labels[None, :]).astype(jnp.float32)
    upper = jnp.triu(jnp.ones((m, m), jnp.float32), k=1)
    pos_mask = same * upper
    neg_mask = (1.0 - same) * upper
    alpha_p = jax.nn.relu(-sim + 1.0 + margin)
    alpha_n = jax.nn.relu(sim + margin)
    loss_p = jnp.sum(jnp.exp(-scale * alpha_p * (sim - (1.0 - margin))) * pos_mask)
    loss_n = jnp.sum(jnp.exp(scale * alpha_n * (sim - margin)) * neg_mask)
    return jnp.log(1.0 + loss_p * loss_n)


if __name__ == "__main__":
    key = jax.random.PRNGKey(0)
    k1, k2 = jax.random.split(key)

    m, d = 8, 32  # batch of 8 feature vectors, hidden dim 32
    feats = jax.random.normal(k1, (m, d), dtype=jnp.float32)
    labels = jax.random.randint(k2, (m,), 0, 4, dtype=jnp.int32)

    loss = circle_loss(feats, labels, scale=32, margin=0.25)
    loss = jax.block_until_ready(loss)

    ref = circle_loss_ref(feats, labels, scale=32, margin=0.25)
    assert jnp.allclose(loss, ref, rtol=1e-4, atol=1e-4), (loss, ref)

    print("KERNEL_OK")
</pallas_src>

<mosaic_0001>
module attributes {stable_mosaic.version = 11 : i64} {
  func.func @_circle_loss_block_kernel(%arg0: i32, %arg1: memref<1xi32, #tpu.memory_space<smem>>, %arg2: memref<1xi32, #tpu.memory_space<smem>>, %arg3: memref<128x32xf32, #tpu.memory_space<vmem>>, %arg4: memref<128x32xf32, #tpu.memory_space<vmem>>, %arg5: memref<128x1xf32, #tpu.memory_space<vmem>>, %arg6: memref<128x1xf32, #tpu.memory_space<vmem>>, %arg7: memref<128x1xi32, #tpu.memory_space<vmem>>, %arg8: memref<1x128xi32, #tpu.memory_space<vmem>>, %arg9: memref<1x2x128xf32, #tpu.memory_space<vmem>>) attributes {dimension_semantics = [#tpu.dimension_semantics<parallel>], iteration_bounds = array<i64: 1>, scalar_prefetch = 2 : i64, scratch_operands = 0 : i64, tpu.core_type = #tpu.core_type<tc>, window_params = [{transform_indices = @transform_0, window_bounds = array<i64: 128, 32>}, {transform_indices = @transform_1, window_bounds = array<i64: 128, 32>}, {transform_indices = @transform_2, window_bounds = array<i64: 128, 1>}, {transform_indices = @transform_3, window_bounds = array<i64: 128, 1>}, {transform_indices = @transform_4, window_bounds = array<i64: 128, 1>}, {transform_indices = @transform_5, window_bounds = array<i64: 1, 128>}, {transform_indices = @transform_6, window_bounds = array<i64: 1, 2, 128>}]} {
    %0 = arith.index_cast %arg0 : i32 to index
    %1 = memref.load %arg1[%0] : memref<1xi32, #tpu.memory_space<smem>>
    %2 = arith.index_cast %arg0 : i32 to index
    %3 = memref.load %arg2[%2] : memref<1xi32, #tpu.memory_space<smem>>
    %c0 = arith.constant 0 : index
    %c0_0 = arith.constant 0 : index
    %4 = vector.load %arg3[%c0, %c0_0] : memref<128x32xf32, #tpu.memory_space<vmem>>, vector<128x32xf32>
    %c0_1 = arith.constant 0 : index
    %c0_2 = arith.constant 0 : index
    %5 = vector.load %arg5[%c0_1, %c0_2] : memref<128x1xf32, #tpu.memory_space<vmem>>, vector<128x1xf32>
    %6 = vector.broadcast %5 : vector<128x1xf32> to vector<128x32xf32>
    %7 = arith.mulf %4, %6 : vector<128x32xf32>
    %c0_3 = arith.constant 0 : index
    %c0_4 = arith.constant 0 : index
    %8 = vector.load %arg4[%c0_3, %c0_4] : memref<128x32xf32, #tpu.memory_space<vmem>>, vector<128x32xf32>
    %c0_5 = arith.constant 0 : index
    %c0_6 = arith.constant 0 : index
    %9 = vector.load %arg6[%c0_5, %c0_6] : memref<128x1xf32, #tpu.memory_space<vmem>>, vector<128x1xf32>
    %10 = vector.broadcast %9 : vector<128x1xf32> to vector<128x32xf32>
    %11 = arith.mulf %8, %10 : vector<128x32xf32>
    %cst = arith.constant dense<0.000000e+00> : vector<128x128xf32>
    %12 = tpu.matmul %7, %11, %cst {dimension_numbers = #tpu.dot_dimension_numbers<[1], [1], [0], [0], [0, 0, 1, 0], [], []>} : vector<128x32xf32>, vector<128x32xf32>, vector<128x128xf32> -> vector<128x128xf32>
    %c0_7 = arith.constant 0 : index
    %c0_8 = arith.constant 0 : index
    %13 = vector.load %arg7[%c0_7, %c0_8] : memref<128x1xi32, #tpu.memory_space<vmem>>, vector<128x1xi32>
    %c0_9 = arith.constant 0 : index
    %c0_10 = arith.constant 0 : index
    %14 = vector.load %arg8[%c0_9, %c0_10] : memref<1x128xi32, #tpu.memory_space<vmem>>, vector<1x128xi32>
    %15 = vector.broadcast %13 : vector<128x1xi32> to vector<128x128xi32>
    %16 = vector.broadcast %14 : vector<1x128xi32> to vector<128x128xi32>
    %17 = arith.cmpi eq, %15, %16 : vector<128x128xi32>
    %18 = tpu.iota {dimensions = array<i32: 0>} : vector<128x128xi32>
    %c128_i32 = arith.constant 128 : i32
    %19 = arith.muli %1, %c128_i32 : i32
    %20 = vector.broadcast %19 : i32 to vector<128x128xi32>
    %21 = arith.addi %18, %20 : vector<128x128xi32>
    %22 = tpu.iota {dimensions = array<i32: 1>} : vector<128x128xi32>
    %c128_i32_11 = arith.constant 128 : i32
    %23 = arith.muli %3, %c128_i32_11 : i32
    %24 = vector.broadcast %23 : i32 to vector<128x128xi32>
    %25 = arith.addi %22, %24 : vector<128x128xi32>
    %26 = arith.cmpi sgt, %25, %21 : vector<128x128xi32>
    %c8_i32 = arith.constant 8 : i32
    %27 = vector.broadcast %c8_i32 : i32 to vector<128x128xi32>
    %28 = arith.cmpi slt, %25, %27 : vector<128x128xi32>
    %29 = arith.andi %26, %28 : vector<128x128xi1>
    %cst_12 = arith.constant 0.000000e+00 : f32
    %30 = vector.broadcast %cst_12 : f32 to vector<128x128xf32>
    %31 = arith.subf %30, %12 : vector<128x128xf32>
    %cst_13 = arith.constant 1.000000e+00 : f32
    %32 = vector.broadcast %cst_13 : f32 to vector<128x128xf32>
    %33 = arith.addf %31, %32 : vector<128x128xf32>
    %cst_14 = arith.constant 2.500000e-01 : f32
    %34 = vector.broadcast %cst_14 : f32 to vector<128x128xf32>
    %35 = arith.addf %33, %34 : vector<128x128xf32>
    %cst_15 = arith.constant 0.000000e+00 : f32
    %36 = vector.broadcast %cst_15 : f32 to vector<128x128xf32>
    %37 = arith.maximumf %35, %36 : vector<128x128xf32>
    %cst_16 = arith.constant 2.500000e-01 : f32
    %38 = vector.broadcast %cst_16 : f32 to vector<128x128xf32>
    %39 = arith.addf %12, %38 : vector<128x128xf32>
    %cst_17 = arith.constant 0.000000e+00 : f32
    %40 = vector.broadcast %cst_17 : f32 to vector<128x128xf32>
    %41 = arith.maximumf %39, %40 : vector<128x128xf32>
    %cst_18 = arith.constant -3.200000e+01 : f32
    %42 = vector.broadcast %cst_18 : f32 to vector<128x128xf32>
    %43 = arith.mulf %42, %37 : vector<128x128xf32>
    %cst_19 = arith.constant 7.500000e-01 : f32
    %44 = vector.broadcast %cst_19 : f32 to vector<128x128xf32>
    %45 = arith.subf %12, %44 : vector<128x128xf32>
    %46 = arith.mulf %43, %45 : vector<128x128xf32>
    %cst_20 = arith.constant 3.200000e+01 : f32
    %47 = vector.broadcast %cst_20 : f32 to vector<128x128xf32>
    %48 = arith.mulf %47, %41 : vector<128x128xf32>
    %cst_21 = arith.constant 2.500000e-01 : f32
    %49 = vector.broadcast %cst_21 : f32 to vector<128x128xf32>
    %50 = arith.subf %12, %49 : vector<128x128xf32>
    %51 = arith.mulf %48, %50 : vector<128x128xf32>
    %52 = arith.select %17, %46, %51 : vector<128x128xi1>, vector<128x128xf32>
    %cst_22 = arith.constant -1.000000e+30 : f32
    %53 = vector.broadcast %cst_22 : f32 to vector<128x128xf32>
    %54 = arith.select %29, %52, %53 : vector<128x128xi1>, vector<128x128xf32>
    %55 = math.exp %54 : vector<128x128xf32>
    %cst_23 = arith.constant 0.000000e+00 : f32
    %56 = vector.broadcast %cst_23 : f32 to vector<128x128xf32>
    %57 = arith.select %17, %55, %56 : vector<128x128xi1>, vector<128x128xf32>
    %58 = arith.subf %55, %57 : vector<128x128xf32>
    %cst_24 = arith.constant dense<0.000000e+00> : vector<128xf32>
    %59 = vector.multi_reduction <add>, %57, %cst_24 [1] : vector<128x128xf32> to vector<128xf32>
    %60 = vector.shape_cast %59 : vector<128xf32> to vector<128x1xf32>
    %61 = vector.shape_cast %60 : vector<128x1xf32> to vector<1x128x1xf32>
    %cst_25 = arith.constant dense<0.000000e+00> : vector<1xf32>
    %62 = vector.multi_reduction <add>, %61, %cst_25 [1, 2] : vector<1x128x1xf32> to vector<1xf32>
    %63 = vector.shape_cast %62 : vector<1xf32> to vector<1x1x1xf32>
    %64 = vector.extract %63[0, 0, 0] : f32 from vector<1x1x1xf32>
    %cst_26 = arith.constant dense<0.000000e+00> : vector<128xf32>
    %65 = vector.multi_reduction <add>, %58, %cst_26 [1] : vector<128x128xf32> to vector<128xf32>
    %66 = vector.shape_cast %65 : vector<128xf32> to vector<128x1xf32>
    %67 = vector.shape_cast %66 : vector<128x1xf32> to vector<1x128x1xf32>
    %cst_27 = arith.constant dense<0.000000e+00> : vector<1xf32>
    %68 = vector.multi_reduction <add>, %67, %cst_27 [1, 2] : vector<1x128x1xf32> to vector<1xf32>
    %69 = vector.shape_cast %68 : vector<1xf32> to vector<1x1x1xf32>
    %70 = vector.extract %69[0, 0, 0] : f32 from vector<1x1x1xf32>
    %71 = tpu.iota {dimensions = array<i32: 1>} : vector<1x2x128xi32>
    %c0_i32 = arith.constant 0 : i32
    %72 = vector.broadcast %c0_i32 : i32 to vector<1x2x128xi32>
    %73 = arith.cmpi eq, %71, %72 : vector<1x2x128xi32>
    %74 = vector.broadcast %64 : f32 to vector<1x2x128xf32>
    %75 = vector.broadcast %70 : f32 to vector<1x2x128xf32>
    %76 = arith.select %73, %74, %75 : vector<1x2x128xi1>, vector<1x2x128xf32>
    %c0_28 = arith.constant 0 : index
    %c0_29 = arith.constant 0 : index
    %c0_30 = arith.constant 0 : index
    %77 = vector.load %arg9[%c0_28, %c0_29, %c0_30] : memref<1x2x128xf32, #tpu.memory_space<vmem>>, vector<1x2x128xf32>
    tpu.vector_store %arg9[%c0_28, %c0_29, %c0_30], %76 {strides = array<i32>} : memref<1x2x128xf32, #tpu.memory_space<vmem>>, vector<1x2x128xf32>,
    return
  }
  func.func @transform_0(%arg0: i32, %arg1: memref<1xi32, #tpu.memory_space<smem>>, %arg2: memref<1xi32, #tpu.memory_space<smem>>) -> (i32, i32) {
    %0 = arith.index_cast %arg0 : i32 to index
    %1 = memref.load %arg1[%0] : memref<1xi32, #tpu.memory_space<smem>>
    %c0_i32 = arith.constant 0 : i32
    %c0_i32_0 = arith.constant 0 : i32
    return %1, %c0_i32 : i32, i32
  }
  func.func @transform_1(%arg0: i32, %arg1: memref<1xi32, #tpu.memory_space<smem>>, %arg2: memref<1xi32, #tpu.memory_space<smem>>) -> (i32, i32) {
    %0 = arith.index_cast %arg0 : i32 to index
    %1 = memref.load %arg2[%0] : memref<1xi32, #tpu.memory_space<smem>>
    %c0_i32 = arith.constant 0 : i32
    %c0_i32_0 = arith.constant 0 : i32
    return %1, %c0_i32 : i32, i32
  }
  func.func @transform_2(%arg0: i32, %arg1: memref<1xi32, #tpu.memory_space<smem>>, %arg2: memref<1xi32, #tpu.memory_space<smem>>) -> (i32, i32) {
    %0 = arith.index_cast %arg0 : i32 to index
    %1 = memref.load %arg1[%0] : memref<1xi32, #tpu.memory_space<smem>>
    %c0_i32 = arith.constant 0 : i32
    %c0_i32_0 = arith.constant 0 : i32
    return %1, %c0_i32 : i32, i32
  }
  func.func @transform_3(%arg0: i32, %arg1: memref<1xi32, #tpu.memory_space<smem>>, %arg2: memref<1xi32, #tpu.memory_space<smem>>) -> (i32, i32) {
    %0 = arith.index_cast %arg0 : i32 to index
    %1 = memref.load %arg2[%0] : memref<1xi32, #tpu.memory_space<smem>>
    %c0_i32 = arith.constant 0 : i32
    %c0_i32_0 = arith.constant 0 : i32
    return %1, %c0_i32 : i32, i32
  }
  func.func @transform_4(%arg0: i32, %arg1: memref<1xi32, #tpu.memory_space<smem>>, %arg2: memref<1xi32, #tpu.memory_space<smem>>) -> (i32, i32) {
    %0 = arith.index_cast %arg0 : i32 to index
    %1 = memref.load %arg1[%0] : memref<1xi32, #tpu.memory_space<smem>>
    %c0_i32 = arith.constant 0 : i32
    %c0_i32_0 = arith.constant 0 : i32
    return %1, %c0_i32 : i32, i32
  }
  func.func @transform_5(%arg0: i32, %arg1: memref<1xi32, #tpu.memory_space<smem>>, %arg2: memref<1xi32, #tpu.memory_space<smem>>) -> (i32, i32) {
    %0 = arith.index_cast %arg0 : i32 to index
    %1 = memref.load %arg2[%0] : memref<1xi32, #tpu.memory_space<smem>>
    %c0_i32 = arith.constant 0 : i32
    %c0_i32_0 = arith.constant 0 : i32
    return %c0_i32, %1 : i32, i32
  }
  func.func @transform_6(%arg0: i32, %arg1: memref<1xi32, #tpu.memory_space<smem>>, %arg2: memref<1xi32, #tpu.memory_space<smem>>) -> (i32, i32, i32) {
    %c0_i32 = arith.constant 0 : i32
    %c0_i32_0 = arith.constant 0 : i32
    %c0_i32_1 = arith.constant 0 : i32
    return %arg0, %c0_i32, %c0_i32_0 : i32, i32, i32
  }
}

</mosaic_0001>

<llo_original>
// kernel: tpu_custom_call.1
$region0: #{tpu_custom_call.1}
  #allocation0 [shape = 'u32[]', space=smem, size = 0x4, offset = 0x4, fixed_abs, tag = 'smem constant byte address 0x4 - core index']
  #allocation1 [shape = 'u32[144,128]{1,0:T(1,128)}', space=vmem, size = 0x12000, scoped, tag = 'internal scratch']
  #allocation2 [shape = 's32[1]{0}', space=sflag, size = 0x4, scoped, tag = 'scoped memory for tpu_custom_call.1']
  #allocation3 [shape = 's32[1]{0:T(128)S(6)}', space=smem, size = 0x200, scoped, tag = 'prefetched SMEM operand 0']
  #allocation4 [shape = 's32[1]{0:T(128)S(6)}', space=smem, size = 0x200, scoped, tag = 'prefetched SMEM operand 1']
  %s0 = inlined_call_operand.<no memory space> [shape: s32[1], index: 0, kind: input, shape index: {}]
  %s1 = inlined_call_operand.<no memory space> [shape: s32[1], index: 1, kind: input, shape index: {}]
  %s2 = inlined_call_operand.vmem [shape: f32[128,32], index: 2, kind: input, shape index: {}]
  %s3 = inlined_call_operand.vmem [shape: f32[128,32], index: 3, kind: input, shape index: {}]
  %s4 = inlined_call_operand.vmem [shape: f32[128,1], index: 4, kind: input, shape index: {}]
  %s5 = inlined_call_operand.vmem [shape: f32[128,1], index: 5, kind: input, shape index: {}]
  %s6 = inlined_call_operand.vmem [shape: s32[128,1], index: 6, kind: input, shape index: {}]
  %s7 = inlined_call_operand.vmem [shape: s32[1,128], index: 7, kind: input, shape index: {}]
  %s8 = inlined_call_operand.hbm [shape: f32[1,2,128], index: 8, kind: output, shape index: {}]
  %s9 = sld [smem:[#allocation0]]
  $region34: #{tpu_custom_call.1} parent=0
    _
  %s11 = ssub.s32 1, %s9
  %s12 = scalar_select 0, %s11, %s9
  %13 = sst [smem:[#allocation3]] %s0
  %14 = sst [smem:[#allocation4]] %s1
  $region1: #{tpu_custom_call.1} parent=0
    #allocation5 [shape = 'u8[1024]{0}', space=vmem, size = 0x400, scoped, tag = 'output window, operand 0, single buffered']
    #allocation6 [shape = 's32[1]{0}', space=sflag, size = 0x4, scoped, tag = 'scoped memory for tpu_custom_call.1']
    %15 = vsyncpa [#allocation6], 0
    // Predicated region
    $region2: #{tpu_custom_call.1} parent=1 // pred_check
      _
    $region3: #{tpu_custom_call.1} parent=1 // pred_check_branch
      %17 = sbr.rel (0) target = $region5
    $region4: #{tpu_custom_call.1} parent=1 // pred_region
      %s18 = sld [smem:[#allocation3]]
      %s19 = smul.u32 16, %s18
      %p20 = scmp.lt.s32.totalorder %s19, 15
      %s21 = scalar_select %p20, %s19, 15
      %s22 = smul.addr %s21, 8
      %s23 = scalar_lea.vmem %s2, %s22
      %s24 = sld [smem:[#allocation3]]
      %s25 = smul.u32 16, %s24
    $region5: #{tpu_custom_call.1} parent=1 // pred_fallthru
      _
    // Predicated region
    $region6: #{tpu_custom_call.1} parent=1 // pred_check
      _
    $region7: #{tpu_custom_call.1} parent=1 // pred_check_branch
      %27 = sbr.rel (0) target = $region9
    $region8: #{tpu_custom_call.1} parent=1 // pred_region
      %s28 = sld [smem:[#allocation4]]
      %s29 = smul.u32 16, %s28
      %p30 = scmp.lt.s32.totalorder %s29, 15
      %s31 = scalar_select %p30, %s29, 15
      %s32 = smul.addr %s31, 8
      %s33 = scalar_lea.vmem %s3, %s32
      %s34 = sld [smem:[#allocation4]]
      %s35 = smul.u32 16, %s34
    $region9: #{tpu_custom_call.1} parent=1 // pred_fallthru
      _
    // Predicated region
    $region10: #{tpu_custom_call.1} parent=1 // pred_check
      _
    $region11: #{tpu_custom_call.1} parent=1 // pred_check_branch
      %37 = sbr.rel (0) target = $region13
    $region12: #{tpu_custom_call.1} parent=1 // pred_region
      %s38 = sld [smem:[#allocation3]]
      %s39 = smul.u32 16, %s38
      %p40 = scmp.lt.s32.totalorder %s39, 15
      %s41 = scalar_select %p40, %s39, 15
      %s42 = smul.addr %s41, 8
      %s43 = scalar_lea.vmem %s4, %s42
      %s44 = sld [smem:[#allocation3]]
      %s45 = smul.u32 16, %s44
    $region13: #{tpu_custom_call.1} parent=1 // pred_fallthru
      _
    // Predicated region
    $region14: #{tpu_custom_call.1} parent=1 // pred_check
      _
    $region15: #{tpu_custom_call.1} parent=1 // pred_check_branch
      %47 = sbr.rel (0) target = $region17
    $region16: #{tpu_custom_call.1} parent=1 // pred_region
      %s48 = sld [smem:[#allocation4]]
      %s49 = smul.u32 16, %s48
      %p50 = scmp.lt.s32.totalorder %s49, 15
      %s51 = scalar_select %p50, %s49, 15
      %s52 = smul.addr %s51, 8
      %s53 = scalar_lea.vmem %s5, %s52
      %s54 = sld [smem:[#allocation4]]
      %s55 = smul.u32 16, %s54
    $region17: #{tpu_custom_call.1} parent=1 // pred_fallthru
      _
    // Predicated region
    $region18: #{tpu_custom_call.1} parent=1 // pred_check
      _
    $region19: #{tpu_custom_call.1} parent=1 // pred_check_branch
      %57 = sbr.rel (0) target = $region21
    $region20: #{tpu_custom_call.1} parent=1 // pred_region
      %s58 = sld [smem:[#allocation3]]
      %s59 = smul.u32 16, %s58
      %p60 = scmp.lt.s32.totalorder %s59, 15
      %s61 = scalar_select %p60, %s59, 15
      %s62 = smul.addr %s61, 8
      %s63 = scalar_lea.vmem %s6, %s62
      %s64 = sld [smem:[#allocation3]]
      %s65 = smul.u32 16, %s64
    $region21: #{tpu_custom_call.1} parent=1 // pred_fallthru
      _
    // Predicated region
    $region22: #{tpu_custom_call.1} parent=1 // pred_check
      _
    $region23: #{tpu_custom_call.1} parent=1 // pred_check_branch
      %67 = sbr.rel (0) target = $region25
    $region24: #{tpu_custom_call.1} parent=1 // pred_region
      %s68 = sld [smem:[#allocation4]]
      %p69 = scmp.lt.s32.totalorder %s68, 0
      %s70 = scalar_select %p69, %s68, 0
      %s71 = scalar_lea.vmem %s7, %s70
      %s72 = sld [smem:[#allocation4]]
    $region25: #{tpu_custom_call.1} parent=1 // pred_fallthru
      _
    %s73 = sld [smem:[#allocation3]]
    %s74 = smul.u32 16, %s73
    %p75 = scmp.lt.s32.totalorder %s74, 15
    %s76 = scalar_select %p75, %s74, 15
    %s77 = smul.addr %s76, 8
    %s78 = scalar_lea.vmem %s2, %s77
    %s79 = sld [smem:[#allocation4]]
    %s80 = smul.u32 16, %s79
    %p81 = scmp.lt.s32.totalorder %s80, 15
    %s82 = scalar_select %p81, %s80, 15
    %s83 = smul.addr %s82, 8
    %s84 = scalar_lea.vmem %s3, %s83
    %s85 = sld [smem:[#allocation3]]
    %s86 = smul.u32 16, %s85
    %p87 = scmp.lt.s32.totalorder %s86, 15
    %s88 = scalar_select %p87, %s86, 15
    %s89 = smul.addr %s88, 8
    %s90 = scalar_lea.vmem %s4, %s89
    %s91 = sld [smem:[#allocation4]]
    %s92 = smul.u32 16, %s91
    %p93 = scmp.lt.s32.totalorder %s92, 15
    %s94 = scalar_select %p93, %s92, 15
    %s95 = smul.addr %s94, 8
    %s96 = scalar_lea.vmem %s5, %s95
    %s97 = sld [smem:[#allocation3]]
    %s98 = smul.u32 16, %s97
    %p99 = scmp.lt.s32.totalorder %s98, 15
    %s100 = scalar_select %p99, %s98, 15
    %s101 = smul.addr %s100, 8
    %s102 = scalar_lea.vmem %s6, %s101
    %s103 = sld [smem:[#allocation4]]
    %p104 = scmp.lt.s32.totalorder %s103, 0
    %s105 = scalar_select %p104, %s103, 0
    %s106 = scalar_lea.vmem %s7, %s105
    %s107 = sld [smem:[#allocation3]]
    %s108 = smul.u32 16, %s107
    %p109 = scmp.lt.s32.totalorder %s108, 15
    %s110 = scalar_select %p109, %s108, 15
    %s111 = smul.addr %s110, 8
    %s112 = scalar_lea.vmem %s2, %s111
    %s113 = sld [smem:[#allocation3]]
    %s114 = smul.u32 16, %s113
    %s115 = sld [smem:[#allocation4]]
    %s116 = smul.u32 16, %s115
    %p117 = scmp.lt.s32.totalorder %s116, 15
    %s118 = scalar_select %p117, %s116, 15
    %s119 = smul.addr %s118, 8
    %s120 = scalar_lea.vmem %s3, %s119
    %s121 = sld [smem:[#allocation4]]
    %s122 = smul.u32 16, %s121
    %s123 = sld [smem:[#allocation3]]
    %s124 = smul.u32 16, %s123
    %p125 = scmp.lt.s32.totalorder %s124, 15
    %s126 = scalar_select %p125, %s124, 15
    %s127 = smul.addr %s126, 8
    %s128 = scalar_lea.vmem %s4, %s127
    %s129 = sld [smem:[#allocation3]]
    %s130 = smul.u32 16, %s129
    %s131 = sld [smem:[#allocation4]]
    %s132 = smul.u32 16, %s131
    %p133 = scmp.lt.s32.totalorder %s132, 15
    %s134 = scalar_select %p133, %s132, 15
    %s135 = smul.addr %s134, 8
    %s136 = scalar_lea.vmem %s5, %s135
    %s137 = sld [smem:[#allocation4]]
    %s138 = smul.u32 16, %s137
    %s139 = sld [smem:[#allocation3]]
    %s140 = smul.u32 16, %s139
    %p141 = scmp.lt.s32.totalorder %s140, 15
    %s142 = scalar_select %p141, %s140, 15
    %s143 = smul.addr %s142, 8
    %s144 = scalar_lea.vmem %s6, %s143
    %s145 = sld [smem:[#allocation3]]
    %s146 = smul.u32 16, %s145
    %s147 = sld [smem:[#allocation4]]
    %p148 = scmp.lt.s32.totalorder %s147, 0
    %s149 = scalar_select %p148, %s147, 0
    %s150 = scalar_lea.vmem %s7, %s149
    %s151 = sld [smem:[#allocation4]]
    %s152 = sld [smem:[#allocation3]]
    %s153 = sld [smem:[#allocation4]]
    %v154 = vld [vmem:[%s112] sm:$0xff]
    %v155 = vld [vmem:[%s112 + $0x8] sm:$0xff]
    %v156 = vld [vmem:[%s112 + $0x10] sm:$0xff]
    %v157 = vld [vmem:[%s112 + $0x18] sm:$0xff]
    %v158 = vld [vmem:[%s112 + $0x20] sm:$0xff]
    %v159 = vld [vmem:[%s112 + $0x28] sm:$0xff]
    %v160 = vld [vmem:[%s112 + $0x30] sm:$0xff]
    %v161 = vld [vmem:[%s112 + $0x38] sm:$0xff]
    %v162 = vld [vmem:[%s112 + $0x40] sm:$0xff]
    %v163 = vld [vmem:[%s112 + $0x48] sm:$0xff]
    %v164 = vld [vmem:[%s112 + $0x50] sm:$0xff]
    %v165 = vld [vmem:[%s112 + $0x58] sm:$0xff]
    %v166 = vld [vmem:[%s112 + $0x60] sm:$0xff]
    %v167 = vld [vmem:[%s112 + $0x68] sm:$0xff]
    %v168 = vld [vmem:[%s112 + $0x70] sm:$0xff]
    %v169 = vld [vmem:[%s112 + $0x78] sm:$0xff]
    %v170 = vld [vmem:[%s128] sm:$0xff]
    %v171 = vld [vmem:[%s128 + $0x8] sm:$0xff]
    %v172 = vld [vmem:[%s128 + $0x10] sm:$0xff]
    %v173 = vld [vmem:[%s128 + $0x18] sm:$0xff]
    %v174 = vld [vmem:[%s128 + $0x20] sm:$0xff]
    %v175 = vld [vmem:[%s128 + $0x28] sm:$0xff]
    %v176 = vld [vmem:[%s128 + $0x30] sm:$0xff]
    %v177 = vld [vmem:[%s128 + $0x38] sm:$0xff]
    %v178 = vld [vmem:[%s128 + $0x40] sm:$0xff]
    %v179 = vld [vmem:[%s128 + $0x48] sm:$0xff]
    %v180 = vld [vmem:[%s128 + $0x50] sm:$0xff]
    %v181 = vld [vmem:[%s128 + $0x58] sm:$0xff]
    %v182 = vld [vmem:[%s128 + $0x60] sm:$0xff]
    %v183 = vld [vmem:[%s128 + $0x68] sm:$0xff]
    %v184 = vld [vmem:[%s128 + $0x70] sm:$0xff]
    %v185 = vld [vmem:[%s128 + $0x78] sm:$0xff]
    %187 = vset.pattern.permute.xlu0 0
    %188 = vperm.xlu0 %187, %v170
    %v189 = vpop.permute.xlu0 %188
    %192 = vset.pattern.permute.xlu0 0
    %193 = vperm.xlu0 %192, %v171
    %v194 = vpop.permute.xlu0 %193
    %197 = vset.pattern.permute.xlu0 0
    %198 = vperm.xlu0 %197, %v172
    %v199 = vpop.permute.xlu0 %198
    %202 = vset.pattern.permute.xlu0 0
    %203 = vperm.xlu0 %202, %v173
    %v204 = vpop.permute.xlu0 %203
    %207 = vset.pattern.permute.xlu0 0
    %208 = vperm.xlu0 %207, %v174
    %v209 = vpop.permute.xlu0 %208
    %212 = vset.pattern.permute.xlu0 0
    %213 = vperm.xlu0 %212, %v175
    %v214 = vpop.permute.xlu0 %213
    %217 = vset.pattern.permute.xlu0 0
    %218 = vperm.xlu0 %217, %v176
    %v219 = vpop.permute.xlu0 %218
    %222 = vset.pattern.permute.xlu0 0
    %223 = vperm.xlu0 %222, %v177
    %v224 = vpop.permute.xlu0 %223
    %227 = vset.pattern.permute.xlu0 0
    %228 = vperm.xlu0 %227, %v178
    %v229 = vpop.permute.xlu0 %228
    %232 = vset.pattern.permute.xlu0 0
    %233 = vperm.xlu0 %232, %v179
    %v234 = vpop.permute.xlu0 %233
    %237 = vset.pattern.permute.xlu0 0
    %238 = vperm.xlu0 %237, %v180
    %v239 = vpop.permute.xlu0 %238
    %242 = vset.pattern.permute.xlu0 0
    %243 = vperm.xlu0 %242, %v181
    %v244 = vpop.permute.xlu0 %243
    %247 = vset.pattern.permute.xlu0 0
    %248 = vperm.xlu0 %247, %v182
    %v249 = vpop.permute.xlu0 %248
    %252 = vset.pattern.permute.xlu0 0
    %253 = vperm.xlu0 %252, %v183
    %v254 = vpop.permute.xlu0 %253
    %257 = vset.pattern.permute.xlu0 0
    %258 = vperm.xlu0 %257, %v184
    %v259 = vpop.permute.xlu0 %258
    %262 = vset.pattern.permute.xlu0 0
    %263 = vperm.xlu0 %262, %v185
    %v264 = vpop.permute.xlu0 %263
    %v266 = vmul.f32 %v154, %v189
    %v267 = vmul.f32 %v155, %v194
    %v268 = vmul.f32 %v156, %v199
    %v269 = vmul.f32 %v157, %v204
    %v270 = vmul.f32 %v158, %v209
    %v271 = vmul.f32 %v159, %v214
    %v272 = vmul.f32 %v160, %v219
    %v273 = vmul.f32 %v161, %v224
    %v274 = vmul.f32 %v162, %v229
    %v275 = vmul.f32 %v163, %v234
    %v276 = vmul.f32 %v164, %v239
    %v277 = vmul.f32 %v165, %v244
    %v278 = vmul.f32 %v166, %v249
    %v279 = vmul.f32 %v167, %v254
    %v280 = vmul.f32 %v168, %v259
    %v281 = vmul.f32 %v169, %v264
    %v282 = vld [vmem:[%s120] sm:$0xff]
    %v283 = vld [vmem:[%s120 + $0x8] sm:$0xff]
    %v284 = vld [vmem:[%s120 + $0x10] sm:$0xff]
    %v285 = vld [vmem:[%s120 + $0x18] sm:$0xff]
    %v286 = vld [vmem:[%s120 + $0x20] sm:$0xff]
    %v287 = vld [vmem:[%s120 + $0x28] sm:$0xff]
    %v288 = vld [vmem:[%s120 + $0x30] sm:$0xff]
    %v289 = vld [vmem:[%s120 + $0x38] sm:$0xff]
    %v290 = vld [vmem:[%s120 + $0x40] sm:$0xff]
    %v291 = vld [vmem:[%s120 + $0x48] sm:$0xff]
    %v292 = vld [vmem:[%s120 + $0x50] sm:$0xff]
    %v293 = vld [vmem:[%s120 + $0x58] sm:$0xff]
    %v294 = vld [vmem:[%s120 + $0x60] sm:$0xff]
    %v295 = vld [vmem:[%s120 + $0x68] sm:$0xff]
    %v296 = vld [vmem:[%s120 + $0x70] sm:$0xff]
    %v297 = vld [vmem:[%s120 + $0x78] sm:$0xff]
    %v298 = vld [vmem:[%s136] sm:$0xff]
    %v299 = vld [vmem:[%s136 + $0x8] sm:$0xff]
    %v300 = vld [vmem:[%s136 + $0x10] sm:$0xff]
    %v301 = vld [vmem:[%s136 + $0x18] sm:$0xff]
    %v302 = vld [vmem:[%s136 + $0x20] sm:$0xff]
    %v303 = vld [vmem:[%s136 + $0x28] sm:$0xff]
    %v304 = vld [vmem:[%s136 + $0x30] sm:$0xff]
    %v305 = vld [vmem:[%s136 + $0x38] sm:$0xff]
    %v306 = vld [vmem:[%s136 + $0x40] sm:$0xff]
    %v307 = vld [vmem:[%s136 + $0x48] sm:$0xff]
    %v308 = vld [vmem:[%s136 + $0x50] sm:$0xff]
    %v309 = vld [vmem:[%s136 + $0x58] sm:$0xff]
    %v310 = vld [vmem:[%s136 + $0x60] sm:$0xff]
    %v311 = vld [vmem:[%s136 + $0x68] sm:$0xff]
    %v312 = vld [vmem:[%s136 + $0x70] sm:$0xff]
    %v313 = vld [vmem:[%s136 + $0x78] sm:$0xff]
    %315 = vset.pattern.permute.xlu0 0
    %316 = vperm.xlu0 %315, %v298
    %v317 = vpop.permute.xlu0 %316
    %320 = vset.pattern.permute.xlu0 0
    %321 = vperm.xlu0 %320, %v299
    %v322 = vpop.permute.xlu0 %321
    %325 = vset.pattern.permute.xlu0 0
    %326 = vperm.xlu0 %325, %v300
    %v327 = vpop.permute.xlu0 %326
    %330 = vset.pattern.permute.xlu0 0
    %331 = vperm.xlu0 %330, %v301
    %v332 = vpop.permute.xlu0 %331
    %335 = vset.pattern.permute.xlu0 0
    %336 = vperm.xlu0 %335, %v302
    %v337 = vpop.permute.xlu0 %336
    %340 = vset.pattern.permute.xlu0 0
    %341 = vperm.xlu0 %340, %v303
    %v342 = vpop.permute.xlu0 %341
    %345 = vset.pattern.permute.xlu0 0
    %346 = vperm.xlu0 %345, %v304
    %v347 = vpop.permute.xlu0 %346
    %350 = vset.pattern.permute.xlu0 0
    %351 = vperm.xlu0 %350, %v305
    %v352 = vpop.permute.xlu0 %351
    %355 = vset.pattern.permute.xlu0 0
    %356 = vperm.xlu0 %355, %v306
    %v357 = vpop.permute.xlu0 %356
    %360 = vset.pattern.permute.xlu0 0
    %361 = vperm.xlu0 %360, %v307
    %v362 = vpop.permute.xlu0 %361
    %365 = vset.pattern.permute.xlu0 0
    %366 = vperm.xlu0 %365, %v308
    %v367 = vpop.permute.xlu0 %366
    %370 = vset.pattern.permute.xlu0 0
    %371 = vperm.xlu0 %370, %v309
    %v372 = vpop.permute.xlu0 %371
    %375 = vset.pattern.permute.xlu0 0
    %376 = vperm.xlu0 %375, %v310
    %v377 = vpop.permute.xlu0 %376
    %380 = vset.pattern.permute.xlu0 0
    %381 = vperm.xlu0 %380, %v311
    %v382 = vpop.permute.xlu0 %381
    %385 = vset.pattern.permute.xlu0 0
    %386 = vperm.xlu0 %385, %v312
    %v387 = vpop.permute.xlu0 %386
    %390 = vset.pattern.permute.xlu0 0
    %391 = vperm.xlu0 %390, %v313
    %v392 = vpop.permute.xlu0 %391
    %v394 = vmul.f32 %v282, %v317
    %v395 = vmul.f32 %v283, %v322
    %v396 = vmul.f32 %v284, %v327
    %v397 = vmul.f32 %v285, %v332
    %v398 = vmul.f32 %v286, %v337
    %v399 = vmul.f32 %v287, %v342
    %v400 = vmul.f32 %v288, %v347
    %v401 = vmul.f32 %v289, %v352
    %v402 = vmul.f32 %v290, %v357
    %v403 = vmul.f32 %v291, %v362
    %v404 = vmul.f32 %v292, %v367
    %v405 = vmul.f32 %v293, %v372
    %v406 = vmul.f32 %v294, %v377
    %v407 = vmul.f32 %v295, %v382
    %v408 = vmul.f32 %v296, %v387
    %v409 = vmul.f32 %v297, %v392
    %vm410 = vcmask 261120
    %v412 = vsel %vm410, %v266, 0
    %v415 = vsel %vm410, %v267, 0
    %v418 = vsel %vm410, %v268, 0
    %v421 = vsel %vm410, %v269, 0
    %v424 = vsel %vm410, %v270, 0
    %v427 = vsel %vm410, %v271, 0
    %v430 = vsel %vm410, %v272, 0
    %v433 = vsel %vm410, %v273, 0
    %v436 = vsel %vm410, %v274, 0
    %v439 = vsel %vm410, %v275, 0
    %v442 = vsel %vm410, %v276, 0
    %v445 = vsel %vm410, %v277, 0
    %v448 = vsel %vm410, %v278, 0
    %v451 = vsel %vm410, %v279, 0
    %v454 = vsel %vm410, %v280, 0
    %v457 = vsel %vm410, %v281, 0
    %v460 = vsel %vm410, %v394, 0
    %v463 = vsel %vm410, %v395, 0
    %v466 = vsel %vm410, %v396, 0
    %v469 = vsel %vm410, %v397, 0
    %v472 = vsel %vm410, %v398, 0
    %v475 = vsel %vm410, %v399, 0
    %v478 = vsel %vm410, %v400, 0
    %v481 = vsel %vm410, %v401, 0
    %v484 = vsel %vm410, %v402, 0
    %v487 = vsel %vm410, %v403, 0
    %v490 = vsel %vm410, %v404, 0
    %v493 = vsel %vm410, %v405, 0
    %v496 = vsel %vm410, %v406, 0
    %v499 = vsel %vm410, %v407, 0
    %v502 = vsel %vm410, %v408, 0
    %v505 = vsel %vm410, %v409, 0
    %507 = vmatprep.subr.mxu0 0.0
    %508 = vmatpush1.xpose.msra.mxu0 %v460
    %509 = vmatprep.subr.mxu0 0.0
    %510 = vmatpush1.xpose.msra.mxu0 %v463
    %511 = vmatprep.subr.mxu0 0.0
    %512 = vmatpush1.xpose.msra.mxu0 %v466
    %513 = vmatprep.subr.mxu0 0.0
    %514 = vmatpush1.xpose.msra.mxu0 %v469
    %515 = vmatprep.subr.mxu0 0.0
    %516 = vmatpush1.xpose.msra.mxu0 %v472
    %517 = vmatprep.subr.mxu0 0.0
    %518 = vmatpush1.xpose.msra.mxu0 %v475
    %519 = vmatprep.subr.mxu0 0.0
    %520 = vmatpush1.xpose.msra.mxu0 %v478
    %521 = vmatprep.subr.mxu0 0.0
    %522 = vmatpush1.xpose.msra.mxu0 %v481
    %523 = vmatprep.subr.mxu0 0.0
    %524 = vmatpush1.xpose.msra.mxu0 %v484
    %525 = vmatprep.subr.mxu0 0.0
    %526 = vmatpush1.xpose.msra.mxu0 %v487
    %527 = vmatprep.subr.mxu0 0.0
    %528 = vmatpush1.xpose.msra.mxu0 %v490
    %529 = vmatprep.subr.mxu0 0.0
    %530 = vmatpush1.xpose.msra.mxu0 %v493
    %531 = vmatprep.subr.mxu0 0.0
    %532 = vmatpush1.xpose.msra.mxu0 %v496
    %533 = vmatprep.subr.mxu0 0.0
    %534 = vmatpush1.xpose.msra.mxu0 %v499
    %535 = vmatprep.subr.mxu0 0.0
    %536 = vmatpush1.xpose.msra.mxu0 %v502
    %537 = vmatprep.subr.mxu0 0.0
    %538 = vmatpush1.xpose.msra.mxu0 %v505
    %539 = vmatprep.subr.mxu0 0.0
    %540 = vmatpush1.xpose.msra.mxu0 0.0
    %541 = vmatprep.subr.mxu0 0.0
    %542 = vmatpush1.xpose.msra.mxu0 0.0
    %543 = vmatprep.subr.mxu0 0.0
    %544 = vmatpush1.xpose.msra.mxu0 0.0
    %545 = vmatprep.subr.mxu0 0.0
    %546 = vmatpush1.xpose.msra.mxu0 0.0
    %547 = vmatprep.subr.mxu0 0.0
    %548 = vmatpush1.xpose.msra.mxu0 0.0
    %549 = vmatprep.subr.mxu0 0.0
    %550 = vmatpush1.xpose.msra.mxu0 0.0
    %551 = vmatprep.subr.mxu0 0.0
    %552 = vmatpush1.xpose.msra.mxu0 0.0
    %553 = vmatprep.subr.mxu0 0.0
    %554 = vmatpush1.xpose.msra.mxu0 0.0
    %555 = vmatprep.subr.mxu0 0.0
    %556 = vmatpush1.xpose.msra.mxu0 0.0
    %557 = vmatprep.subr.mxu0 0.0
    %558 = vmatpush1.xpose.msra.mxu0 0.0
    %559 = vmatprep.subr.mxu0 0.0
    %560 = vmatpush1.xpose.msra.mxu0 0.0
    %561 = vmatprep.subr.mxu0 0.0
    %562 = vmatpush1.xpose.msra.mxu0 0.0
    %563 = vmatprep.subr.mxu0 0.0
    %564 = vmatpush1.xpose.msra.mxu0 0.0
    %565 = vmatprep.subr.mxu0 0.0
    %566 = vmatpush1.xpose.msra.mxu0 0.0
    %567 = vmatprep.subr.mxu0 0.0
    %568 = vmatpush1.xpose.msra.mxu0 0.0
    %569 = vmatprep.subr.mxu0 0.0
    %570 = vmatpush1.xpose.msra.mxu0 0.0
    %571 = vmatprep.mubr.f32.mxu0 0.0
    %572 = vmatmul.mubr.f32.gmra.mrb[0].mxu0 %v412
    %v573 = vpop.f32.mrb[0].mxu0
    %v574 = vadd.f32 0.0, %v573
    %v575 = vpop.f32.mrb[0].mxu0
    %576 = vmatprep.mubr.f32.mxu0 0.0
    %577 = vmatmul.mubr.f32.gmra.mrb[0].mxu0 %v415
    %v578 = vpop.f32.mrb[0].mxu0
    %v579 = vadd.f32 0.0, %v578
    %v580 = vpop.f32.mrb[0].mxu0
    %581 = vmatprep.mubr.f32.mxu0 0.0
    %582 = vmatmul.mubr.f32.gmra.mrb[0].mxu0 %v418
    %v583 = vpop.f32.mrb[0].mxu0
    %v584 = vadd.f32 0.0, %v583
    %v585 = vpop.f32.mrb[0].mxu0
    %586 = vmatprep.mubr.f32.mxu0 0.0
    %587 = vmatmul.mubr.f32.gmra.mrb[0].mxu0 %v421
    %v588 = vpop.f32.mrb[0].mxu0
    %v589 = vadd.f32 0.0, %v588
    %v590 = vpop.f32.mrb[0].mxu0
    %591 = vmatprep.mubr.f32.mxu0 0.0
    %592 = vmatmul.mubr.f32.gmra.mrb[0].mxu0 %v424
    %v593 = vpop.f32.mrb[0].mxu0
    %v594 = vadd.f32 0.0, %v593
    %v595 = vpop.f32.mrb[0].mxu0
    %596 = vmatprep.mubr.f32.mxu0 0.0
    %597 = vmatmul.mubr.f32.gmra.mrb[0].mxu0 %v427
    %v598 = vpop.f32.mrb[0].mxu0
    %v599 = vadd.f32 0.0, %v598
    %v600 = vpop.f32.mrb[0].mxu0
    %601 = vmatprep.mubr.f32.mxu0 0.0
    %602 = vmatmul.mubr.f32.gmra.mrb[0].mxu0 %v430
    %v603 = vpop.f32.mrb[0].mxu0
    %v604 = vadd.f32 0.0, %v603
    %v605 = vpop.f32.mrb[0].mxu0
    %606 = vmatprep.mubr.f32.mxu0 0.0
    %607 = vmatmul.mubr.f32.gmra.mrb[0].mxu0 %v433
    %v608 = vpop.f32.mrb[0].mxu0
    %v609 = vadd.f32 0.0, %v608
    %v610 = vpop.f32.mrb[0].mxu0
    %611 = vmatprep.mubr.f32.mxu0 0.0
    %612 = vmatmul.mubr.f32.gmra.mrb[0].mxu0 %v436
    %v613 = vpop.f32.mrb[0].mxu0
    %v614 = vadd.f32 0.0, %v613
    %v615 = vpop.f32.mrb[0].mxu0
    %616 = vmatprep.mubr.f32.mxu0 0.0
    %617 = vmatmul.mubr.f32.gmra.mrb[0].mxu0 %v439
    %v618 = vpop.f32.mrb[0].mxu0
    %v619 = vadd.f32 0.0, %v618
    %v620 = vpop.f32.mrb[0].mxu0
    %621 = vmatprep.mubr.f32.mxu0 0.0
    %622 = vmatmul.mubr.f32.gmra.mrb[0].mxu0 %v442
    %v623 = vpop.f32.mrb[0].mxu0
    %v624 = vadd.f32 0.0, %v623
    %v625 = vpop.f32.mrb[0].mxu0
    %626 = vmatprep.mubr.f32.mxu0 0.0
    %627 = vmatmul.mubr.f32.gmra.mrb[0].mxu0 %v445
    %v628 = vpop.f32.mrb[0].mxu0
    %v629 = vadd.f32 0.0, %v628
    %v630 = vpop.f32.mrb[0].mxu0
    %631 = vmatprep.mubr.f32.mxu0 0.0
    %632 = vmatmul.mubr.f32.gmra.mrb[0].mxu0 %v448
    %v633 = vpop.f32.mrb[0].mxu0
    %v634 = vadd.f32 0.0, %v633
    %v635 = vpop.f32.mrb[0].mxu0
    %636 = vmatprep.mubr.f32.mxu0 0.0
    %637 = vmatmul.mubr.f32.gmra.mrb[0].mxu0 %v451
    %v638 = vpop.f32.mrb[0].mxu0
    %v639 = vadd.f32 0.0, %v638
    %v640 = vpop.f32.mrb[0].mxu0
    %641 = vmatprep.mubr.f32.mxu0 0.0
    %642 = vmatmul.mubr.f32.gmra.mrb[0].mxu0 %v454
    %v643 = vpop.f32.mrb[0].mxu0
    %v644 = vadd.f32 0.0, %v643
    %v645 = vpop.f32.mrb[0].mxu0
    %646 = vmatprep.mubr.f32.mxu0 0.0
    %647 = vmatmul.mubr.f32.gmra.mrb[0].mxu0 %v457
    %v648 = vpop.f32.mrb[0].mxu0
    %v649 = vadd.f32 0.0, %v648
    %v650 = vpop.f32.mrb[0].mxu0
    %651 = vdwg.mxu0
    %v652 = vld [vmem:[%s144] sm:$0xff]
    %v653 = vld [vmem:[%s144 + $0x8] sm:$0xff]
    %v654 = vld [vmem:[%s144 + $0x10] sm:$0xff]
    %v655 = vld [vmem:[%s144 + $0x18] sm:$0xff]
    %v656 = vld [vmem:[%s144 + $0x20] sm:$0xff]
    %v657 = vld [vmem:[%s144 + $0x28] sm:$0xff]
    %v658 = vld [vmem:[%s144 + $0x30] sm:$0xff]
    %v659 = vld [vmem:[%s144 + $0x38] sm:$0xff]
    %v660 = vld [vmem:[%s144 + $0x40] sm:$0xff]
    %v661 = vld [vmem:[%s144 + $0x48] sm:$0xff]
    %v662 = vld [vmem:[%s144 + $0x50] sm:$0xff]
    %v663 = vld [vmem:[%s144 + $0x58] sm:$0xff]
    %v664 = vld [vmem:[%s144 + $0x60] sm:$0xff]
    %v665 = vld [vmem:[%s144 + $0x68] sm:$0xff]
    %v666 = vld [vmem:[%s144 + $0x70] sm:$0xff]
    %v667 = vld [vmem:[%s144 + $0x78] sm:$0xff]
    %v668 = vld [vmem:[%s150] sm:$0x1]
    %669 = vset.pattern.permute.xlu0 0
    %670 = vperm.xlu0 %669, %v652
    %v671 = vpop.permute.xlu0 %670
    %672 = vset.pattern.permute.xlu0 0
    %673 = vperm.xlu0 %672, %v653
    %v674 = vpop.permute.xlu0 %673
    %675 = vset.pattern.permute.xlu0 0
    %676 = vperm.xlu0 %675, %v654
    %v677 = vpop.permute.xlu0 %676
    %678 = vset.pattern.permute.xlu0 0
    %679 = vperm.xlu0 %678, %v655
    %v680 = vpop.permute.xlu0 %679
    %681 = vset.pattern.permute.xlu0 0
    %682 = vperm.xlu0 %681, %v656
    %v683 = vpop.permute.xlu0 %682
    %684 = vset.pattern.permute.xlu0 0
    %685 = vperm.xlu0 %684, %v657
    %v686 = vpop.permute.xlu0 %685
    %687 = vset.pattern.permute.xlu0 0
    %688 = vperm.xlu0 %687, %v658
    %v689 = vpop.permute.xlu0 %688
    %690 = vset.pattern.permute.xlu0 0
    %691 = vperm.xlu0 %690, %v659
    %v692 = vpop.permute.xlu0 %691
    %693 = vset.pattern.permute.xlu0 0
    %694 = vperm.xlu0 %693, %v660
    %v695 = vpop.permute.xlu0 %694
    %696 = vset.pattern.permute.xlu0 0
    %697 = vperm.xlu0 %696, %v661
    %v698 = vpop.permute.xlu0 %697
    %699 = vset.pattern.permute.xlu0 0
    %700 = vperm.xlu0 %699, %v662
    %v701 = vpop.permute.xlu0 %700
    %702 = vset.pattern.permute.xlu0 0
    %703 = vperm.xlu0 %702, %v663
    %v704 = vpop.permute.xlu0 %703
    %705 = vset.pattern.permute.xlu0 0
    %706 = vperm.xlu0 %705, %v664
    %v707 = vpop.permute.xlu0 %706
    %708 = vset.pattern.permute.xlu0 0
    %709 = vperm.xlu0 %708, %v665
    %v710 = vpop.permute.xlu0 %709
    %711 = vset.pattern.permute.xlu0 0
    %712 = vperm.xlu0 %711, %v666
    %v713 = vpop.permute.xlu0 %712
    %714 = vset.pattern.permute.xlu0 0
    %715 = vperm.xlu0 %714, %v667
    %v716 = vpop.permute.xlu0 %715
    %v717 = vlaneseq
    %v718 = vshrl.u32 %v717, 7
    %v719 = vsub.s32 0, %v718
    %v720 = vrot.slane %v668, %v719
    %vm721 = vcmp.eq.s32.totalorder %v671, %v720
    %vm722 = vcmp.eq.s32.totalorder %v674, %v720
    %vm723 = vcmp.eq.s32.totalorder %v677, %v720
    %vm724 = vcmp.eq.s32.totalorder %v680, %v720
    %vm725 = vcmp.eq.s32.totalorder %v683, %v720
    %vm726 = vcmp.eq.s32.totalorder %v686, %v720
    %vm727 = vcmp.eq.s32.totalorder %v689, %v720
    %vm728 = vcmp.eq.s32.totalorder %v692, %v720
    %vm729 = vcmp.eq.s32.totalorder %v695, %v720
    %vm730 = vcmp.eq.s32.totalorder %v698, %v720
    %vm731 = vcmp.eq.s32.totalorder %v701, %v720
    %vm732 = vcmp.eq.s32.totalorder %v704, %v720
    %vm733 = vcmp.eq.s32.totalorder %v707, %v720
    %vm734 = vcmp.eq.s32.totalorder %v710, %v720
    %vm735 = vcmp.eq.s32.totalorder %v713, %v720
    %vm736 = vcmp.eq.s32.totalorder %v716, %v720
    %v737 = vlaneseq
    %v738 = vshrl.u32 %v737, 7
    %v739 = vadd.s32 %v738, 8
    %v740 = vadd.s32 %v738, 16
    %v741 = vadd.s32 %v738, 24
    %v742 = vadd.s32 %v738, 32
    %v743 = vadd.s32 %v738, 40
    %v744 = vadd.s32 %v738, 48
    %v745 = vadd.s32 %v738, 56
    %v746 = vadd.s32 %v738, 64
    %v747 = vadd.s32 %v738, 72
    %v748 = vadd.s32 %v738, 80
    %v749 = vadd.s32 %v738, 88
    %v750 = vadd.s32 %v738, 96
    %v751 = vadd.s32 %v738, 104
    %v752 = vadd.s32 %v738, 112
    %v753 = vadd.s32 %v738, 120
    %s754 = smul.u32 %s152, 128
    %v755 = vstv %s754
    %v756 = vadd.s32 %v738, %v755
    %v757 = vadd.s32 %v739, %v755
    %v758 = vadd.s32 %v740, %v755
    %v759 = vadd.s32 %v741, %v755
    %v760 = vadd.s32 %v742, %v755
    %v761 = vadd.s32 %v743, %v755
    %v762 = vadd.s32 %v744, %v755
    %v763 = vadd.s32 %v745, %v755
    %v764 = vadd.s32 %v746, %v755
    %v765 = vadd.s32 %v747, %v755
    %v766 = vadd.s32 %v748, %v755
    %v767 = vadd.s32 %v749, %v755
    %v768 = vadd.s32 %v750, %v755
    %v769 = vadd.s32 %v751, %v755
    %v770 = vadd.s32 %v752, %v755
    %v771 = vadd.s32 %v753, %v755
    %v772 = vlaneseq
    %v773 = vand.u32 %v772, 127
    %s774 = smul.u32 %s153, 128
    %v775 = vstv %s774
    %v776 = vadd.s32 %v773, %v775
    %vm777 = vcmp.gt.s32.totalorder %v776, %v756
    %vm778 = vcmp.gt.s32.totalorder %v776, %v757
    %vm779 = vcmp.gt.s32.totalorder %v776, %v758
    %vm780 = vcmp.gt.s32.totalorder %v776, %v759
    %vm781 = vcmp.gt.s32.totalorder %v776, %v760
    %vm782 = vcmp.gt.s32.totalorder %v776, %v761
    %vm783 = vcmp.gt.s32.totalorder %v776, %v762
    %vm784 = vcmp.gt.s32.totalorder %v776, %v763
    %vm785 = vcmp.gt.s32.totalorder %v776, %v764
    %vm786 = vcmp.gt.s32.totalorder %v776, %v765
    %vm787 = vcmp.gt.s32.totalorder %v776, %v766
    %vm788 = vcmp.gt.s32.totalorder %v776, %v767
    %vm789 = vcmp.gt.s32.totalorder %v776, %v768
    %vm790 = vcmp.gt.s32.totalorder %v776, %v769
    %vm791 = vcmp.gt.s32.totalorder %v776, %v770
    %vm792 = vcmp.gt.s32.totalorder %v776, %v771
    %vm793 = vcmp.lt.s32.totalorder %v776, 8
    %vm794 = vmand %vm777, %vm793
    %vm795 = vmand %vm778, %vm793
    %vm796 = vmand %vm779, %vm793
    %vm797 = vmand %vm780, %vm793
    %vm798 = vmand %vm781, %vm793
    %vm799 = vmand %vm782, %vm793
    %vm800 = vmand %vm783, %vm793
    %vm801 = vmand %vm784, %vm793
    %vm802 = vmand %vm785, %vm793
    %vm803 = vmand %vm786, %vm793
    %vm804 = vmand %vm787, %vm793
    %vm805 = vmand %vm788, %vm793
    %vm806 = vmand %vm789, %vm793
    %vm807 = vmand %vm790, %vm793
    %vm808 = vmand %vm791, %vm793
    %vm809 = vmand %vm792, %vm793
    %v810 = vsub.f32 0.0, %v574
    %v811 = vsub.f32 0.0, %v579
    %v812 = vsub.f32 0.0, %v584
    %v813 = vsub.f32 0.0, %v589
    %v814 = vsub.f32 0.0, %v594
    %v815 = vsub.f32 0.0, %v599
    %v816 = vsub.f32 0.0, %v604
    %v817 = vsub.f32 0.0, %v609
    %v818 = vsub.f32 0.0, %v614
    %v819 = vsub.f32 0.0, %v619
    %v820 = vsub.f32 0.0, %v624
    %v821 = vsub.f32 0.0, %v629
    %v822 = vsub.f32 0.0, %v634
    %v823 = vsub.f32 0.0, %v639
    %v824 = vsub.f32 0.0, %v644
    %v825 = vsub.f32 0.0, %v649
    %v826 = vadd.f32 %v810, 1.0
    %v827 = vadd.f32 %v811, 1.0
    %v828 = vadd.f32 %v812, 1.0
    %v829 = vadd.f32 %v813, 1.0
    %v830 = vadd.f32 %v814, 1.0
    %v831 = vadd.f32 %v815, 1.0
    %v832 = vadd.f32 %v816, 1.0
    %v833 = vadd.f32 %v817, 1.0
    %v834 = vadd.f32 %v818, 1.0
    %v835 = vadd.f32 %v819, 1.0
    %v836 = vadd.f32 %v820, 1.0
    %v837 = vadd.f32 %v821, 1.0
    %v838 = vadd.f32 %v822, 1.0
    %v839 = vadd.f32 %v823, 1.0
    %v840 = vadd.f32 %v824, 1.0
    %v841 = vadd.f32 %v825, 1.0
    %v842 = vadd.f32 %v826, 0.25
    %v843 = vadd.f32 %v827, 0.25
    %v844 = vadd.f32 %v828, 0.25
    %v845 = vadd.f32 %v829, 0.25
    %v846 = vadd.f32 %v830, 0.25
    %v847 = vadd.f32 %v831, 0.25
    %v848 = vadd.f32 %v832, 0.25
    %v849 = vadd.f32 %v833, 0.25
    %v850 = vadd.f32 %v834, 0.25
    %v851 = vadd.f32 %v835, 0.25
    %v852 = vadd.f32 %v836, 0.25
    %v853 = vadd.f32 %v837, 0.25
    %v854 = vadd.f32 %v838, 0.25
    %v855 = vadd.f32 %v839, 0.25
    %v856 = vadd.f32 %v840, 0.25
    %v857 = vadd.f32 %v841, 0.25
    %v858 = vmax.f32 %v842, 0.0
    %v859 = vmax.f32 %v843, 0.0
    %v860 = vmax.f32 %v844, 0.0
    %v861 = vmax.f32 %v845, 0.0
    %v862 = vmax.f32 %v846, 0.0
    %v863 = vmax.f32 %v847, 0.0
    %v864 = vmax.f32 %v848, 0.0
    %v865 = vmax.f32 %v849, 0.0
    %v866 = vmax.f32 %v850, 0.0
    %v867 = vmax.f32 %v851, 0.0
    %v868 = vmax.f32 %v852, 0.0
    %v869 = vmax.f32 %v853, 0.0
    %v870 = vmax.f32 %v854, 0.0
    %v871 = vmax.f32 %v855, 0.0
    %v872 = vmax.f32 %v856, 0.0
    %v873 = vmax.f32 %v857, 0.0
    %v874 = vadd.f32 %v574, 0.25
    %v875 = vadd.f32 %v579, 0.25
    %v876 = vadd.f32 %v584, 0.25
    %v877 = vadd.f32 %v589, 0.25
    %v878 = vadd.f32 %v594, 0.25
    %v879 = vadd.f32 %v599, 0.25
    %v880 = vadd.f32 %v604, 0.25
    %v881 = vadd.f32 %v609, 0.25
    %v882 = vadd.f32 %v614, 0.25
    %v883 = vadd.f32 %v619, 0.25
    %v884 = vadd.f32 %v624, 0.25
    %v885 = vadd.f32 %v629, 0.25
    %v886 = vadd.f32 %v634, 0.25
    %v887 = vadd.f32 %v639, 0.25
    %v888 = vadd.f32 %v644, 0.25
    %v889 = vadd.f32 %v649, 0.25
    %v890 = vmax.f32 %v874, 0.0
    %v891 = vmax.f32 %v875, 0.0
    %v892 = vmax.f32 %v876, 0.0
    %v893 = vmax.f32 %v877, 0.0
    %v894 = vmax.f32 %v878, 0.0
    %v895 = vmax.f32 %v879, 0.0
    %v896 = vmax.f32 %v880, 0.0
    %v897 = vmax.f32 %v881, 0.0
    %v898 = vmax.f32 %v882, 0.0
    %v899 = vmax.f32 %v883, 0.0
    %v900 = vmax.f32 %v884, 0.0
    %v901 = vmax.f32 %v885, 0.0
    %v902 = vmax.f32 %v886, 0.0
    %v903 = vmax.f32 %v887, 0.0
    %v904 = vmax.f32 %v888, 0.0
    %v905 = vmax.f32 %v889, 0.0
    %v906 = vmul.f32 %v858, -32.0
    %v907 = vmul.f32 %v859, -32.0
    %v908 = vmul.f32 %v860, -32.0
    %v909 = vmul.f32 %v861, -32.0
    %v910 = vmul.f32 %v862, -32.0
    %v911 = vmul.f32 %v863, -32.0
    %v912 = vmul.f32 %v864, -32.0
    %v913 = vmul.f32 %v865, -32.0
    %v914 = vmul.f32 %v866, -32.0
    %v915 = vmul.f32 %v867, -32.0
    %v916 = vmul.f32 %v868, -32.0
    %v917 = vmul.f32 %v869, -32.0
    %v918 = vmul.f32 %v870, -32.0
    %v919 = vmul.f32 %v871, -32.0
    %v920 = vmul.f32 %v872, -32.0
    %v921 = vmul.f32 %v873, -32.0
    %v922 = vsub.f32 %v574, 0.75
    %v923 = vsub.f32 %v579, 0.75
    %v924 = vsub.f32 %v584, 0.75
    %v925 = vsub.f32 %v589, 0.75
    %v926 = vsub.f32 %v594, 0.75
    %v927 = vsub.f32 %v599, 0.75
    %v928 = vsub.f32 %v604, 0.75
    %v929 = vsub.f32 %v609, 0.75
    %v930 = vsub.f32 %v614, 0.75
    %v931 = vsub.f32 %v619, 0.75
    %v932 = vsub.f32 %v624, 0.75
    %v933 = vsub.f32 %v629, 0.75
    %v934 = vsub.f32 %v634, 0.75
    %v935 = vsub.f32 %v639, 0.75
    %v936 = vsub.f32 %v644, 0.75
    %v937 = vsub.f32 %v649, 0.75
    %v938 = vmul.f32 %v906, %v922
    %v939 = vmul.f32 %v907, %v923
    %v940 = vmul.f32 %v908, %v924
    %v941 = vmul.f32 %v909, %v925
    %v942 = vmul.f32 %v910, %v926
    %v943 = vmul.f32 %v911, %v927
    %v944 = vmul.f32 %v912, %v928
    %v945 = vmul.f32 %v913, %v929
    %v946 = vmul.f32 %v914, %v930
    %v947 = vmul.f32 %v915, %v931
    %v948 = vmul.f32 %v916, %v932
    %v949 = vmul.f32 %v917, %v933
    %v950 = vmul.f32 %v918, %v934
    %v951 = vmul.f32 %v919, %v935
    %v952 = vmul.f32 %v920, %v936
    %v953 = vmul.f32 %v921, %v937
    %v954 = vmul.f32 %v890, 32.0
    %v955 = vmul.f32 %v891, 32.0
    %v956 = vmul.f32 %v892, 32.0
    %v957 = vmul.f32 %v893, 32.0
    %v958 = vmul.f32 %v894, 32.0
    %v959 = vmul.f32 %v895, 32.0
    %v960 = vmul.f32 %v896, 32.0
    %v961 = vmul.f32 %v897, 32.0
    %v962 = vmul.f32 %v898, 32.0
    %v963 = vmul.f32 %v899, 32.0
    %v964 = vmul.f32 %v900, 32.0
    %v965 = vmul.f32 %v901, 32.0
    %v966 = vmul.f32 %v902, 32.0
    %v967 = vmul.f32 %v903, 32.0
    %v968 = vmul.f32 %v904, 32.0
    %v969 = vmul.f32 %v905, 32.0
    %v970 = vsub.f32 %v574, 0.25
    %v971 = vsub.f32 %v579, 0.25
    %v972 = vsub.f32 %v584, 0.25
    %v973 = vsub.f32 %v589, 0.25
    %v974 = vsub.f32 %v594, 0.25
    %v975 = vsub.f32 %v599, 0.25
    %v976 = vsub.f32 %v604, 0.25
    %v977 = vsub.f32 %v609, 0.25
    %v978 = vsub.f32 %v614, 0.25
    %v979 = vsub.f32 %v619, 0.25
    %v980 = vsub.f32 %v624, 0.25
    %v981 = vsub.f32 %v629, 0.25
    %v982 = vsub.f32 %v634, 0.25
    %v983 = vsub.f32 %v639, 0.25
    %v984 = vsub.f32 %v644, 0.25
    %v985 = vsub.f32 %v649, 0.25
    %v986 = vmul.f32 %v954, %v970
    %v987 = vmul.f32 %v955, %v971
    %v988 = vmul.f32 %v956, %v972
    %v989 = vmul.f32 %v957, %v973
    %v990 = vmul.f32 %v958, %v974
    %v991 = vmul.f32 %v959, %v975
    %v992 = vmul.f32 %v960, %v976
    %v993 = vmul.f32 %v961, %v977
    %v994 = vmul.f32 %v962, %v978
    %v995 = vmul.f32 %v963, %v979
    %v996 = vmul.f32 %v964, %v980
    %v997 = vmul.f32 %v965, %v981
    %v998 = vmul.f32 %v966, %v982
    %v999 = vmul.f32 %v967, %v983
    %v1000 = vmul.f32 %v968, %v984
    %v1001 = vmul.f32 %v969, %v985
    %v1002 = vsel %vm721, %v938, %v986
    %v1003 = vsel %vm722, %v939, %v987
    %v1004 = vsel %vm723, %v940, %v988
    %v1005 = vsel %vm724, %v941, %v989
    %v1006 = vsel %vm725, %v942, %v990
    %v1007 = vsel %vm726, %v943, %v991
    %v1008 = vsel %vm727, %v944, %v992
    %v1009 = vsel %vm728, %v945, %v993
    %v1010 = vsel %vm729, %v946, %v994
    %v1011 = vsel %vm730, %v947, %v995
    %v1012 = vsel %vm731, %v948, %v996
    %v1013 = vsel %vm732, %v949, %v997
    %v1014 = vsel %vm733, %v950, %v998
    %v1015 = vsel %vm734, %v951, %v999
    %v1016 = vsel %vm735, %v952, %v1000
    %v1017 = vsel %vm736, %v953, %v1001
    %v1018 = vsel %vm794, %v1002, -1e+30
    %v1019 = vsel %vm795, %v1003, -1e+30
    %v1020 = vsel %vm796, %v1004, -1e+30
    %v1021 = vsel %vm797, %v1005, -1e+30
    %v1022 = vsel %vm798, %v1006, -1e+30
    %v1023 = vsel %vm799, %v1007, -1e+30
    %v1024 = vsel %vm800, %v1008, -1e+30
    %v1025 = vsel %vm801, %v1009, -1e+30
    %v1026 = vsel %vm802, %v1010, -1e+30
    %v1027 = vsel %vm803, %v1011, -1e+30
    %v1028 = vsel %vm804, %v1012, -1e+30
    %v1029 = vsel %vm805, %v1013, -1e+30
    %v1030 = vsel %vm806, %v1014, -1e+30
    %v1031 = vsel %vm807, %v1015, -1e+30
    %v1032 = vsel %vm808, %v1016, -1e+30
    %v1033 = vsel %vm809, %v1017, -1e+30
    %v1034 = vmul.f32 %v1018, 1.442695
    %v1035 = vpow.pop %v1034
    %v1036 = vmul.f32 %v1019, 1.442695
    %v1037 = vpow.pop %v1036
    %v1038 = vmul.f32 %v1020, 1.442695
    %v1039 = vpow.pop %v1038
    %v1040 = vmul.f32 %v1021, 1.442695
    %v1041 = vpow.pop %v1040
    %v1042 = vmul.f32 %v1022, 1.442695
    %v1043 = vpow.pop %v1042
    %v1044 = vmul.f32 %v1023, 1.442695
    %v1045 = vpow.pop %v1044
    %v1046 = vmul.f32 %v1024, 1.442695
    %v1047 = vpow.pop %v1046
    %v1048 = vmul.f32 %v1025, 1.442695
    %v1049 = vpow.pop %v1048
    %v1050 = vmul.f32 %v1026, 1.442695
    %v1051 = vpow.pop %v1050
    %v1052 = vmul.f32 %v1027, 1.442695
    %v1053 = vpow.pop %v1052
    %v1054 = vmul.f32 %v1028, 1.442695
    %v1055 = vpow.pop %v1054
    %v1056 = vmul.f32 %v1029, 1.442695
    %v1057 = vpow.pop %v1056
    %v1058 = vmul.f32 %v1030, 1.442695
    %v1059 = vpow.pop %v1058
    %v1060 = vmul.f32 %v1031, 1.442695
    %v1061 = vpow.pop %v1060
    %v1062 = vmul.f32 %v1032, 1.442695
    %v1063 = vpow.pop %v1062
    %v1064 = vmul.f32 %v1033, 1.442695
    %v1065 = vpow.pop %v1064
    %v1066 = vsel %vm721, %v1035, 0.0
    %v1067 = vsel %vm722, %v1037, 0.0
    %v1068 = vsel %vm723, %v1039, 0.0
    %v1069 = vsel %vm724, %v1041, 0.0
    %v1070 = vsel %vm725, %v1043, 0.0
    %v1071 = vsel %vm726, %v1045, 0.0
    %v1072 = vsel %vm727, %v1047, 0.0
    %v1073 = vsel %vm728, %v1049, 0.0
    %v1074 = vsel %vm729, %v1051, 0.0
    %v1075 = vsel %vm730, %v1053, 0.0
    %v1076 = vsel %vm731, %v1055, 0.0
    %v1077 = vsel %vm732, %v1057, 0.0
    %v1078 = vsel %vm733, %v1059, 0.0
    %v1079 = vsel %vm734, %v1061, 0.0
    %v1080 = vsel %vm735, %v1063, 0.0
    %v1081 = vsel %vm736, %v1065, 0.0
    %v1082 = vsub.f32 %v1035, %v1066
    %v1083 = vsub.f32 %v1037, %v1067
    %v1084 = vsub.f32 %v1039, %v1068
    %v1085 = vsub.f32 %v1041, %v1069
    %v1086 = vsub.f32 %v1043, %v1070
    %v1087 = vsub.f32 %v1045, %v1071
    %v1088 = vsub.f32 %v1047, %v1072
    %v1089 = vsub.f32 %v1049, %v1073
    %v1090 = vsub.f32 %v1051, %v1074
    %v1091 = vsub.f32 %v1053, %v1075
    %v1092 = vsub.f32 %v1055, %v1076
    %v1093 = vsub.f32 %v1057, %v1077
    %v1094 = vsub.f32 %v1059, %v1078
    %v1095 = vsub.f32 %v1061, %v1079
    %v1096 = vsub.f32 %v1063, %v1080
    %v1097 = vsub.f32 %v1065, %v1081
    %1098 = vadd.xlane.f32.xlu0 %v1066
    %v1099 = vpop.xlane.xlu0 %1098
    %1100 = vadd.xlane.f32.xlu0 %v1067
    %v1101 = vpop.xlane.xlu0 %1100
    %1102 = vadd.xlane.f32.xlu0 %v1068
    %v1103 = vpop.xlane.xlu0 %1102
    %1104 = vadd.xlane.f32.xlu0 %v1069
    %v1105 = vpop.xlane.xlu0 %1104
    %1106 = vadd.xlane.f32.xlu0 %v1070
    %v1107 = vpop.xlane.xlu0 %1106
    %1108 = vadd.xlane.f32.xlu0 %v1071
    %v1109 = vpop.xlane.xlu0 %1108
    %1110 = vadd.xlane.f32.xlu0 %v1072
    %v1111 = vpop.xlane.xlu0 %1110
    %1112 = vadd.xlane.f32.xlu0 %v1073
    %v1113 = vpop.xlane.xlu0 %1112
    %1114 = vadd.xlane.f32.xlu0 %v1074
    %v1115 = vpop.xlane.xlu0 %1114
    %1116 = vadd.xlane.f32.xlu0 %v1075
    %v1117 = vpop.xlane.xlu0 %1116
    %1118 = vadd.xlane.f32.xlu0 %v1076
    %v1119 = vpop.xlane.xlu0 %1118
    %1120 = vadd.xlane.f32.xlu0 %v1077
    %v1121 = vpop.xlane.xlu0 %1120
    %1122 = vadd.xlane.f32.xlu0 %v1078
    %v1123 = vpop.xlane.xlu0 %1122
    %1124 = vadd.xlane.f32.xlu0 %v1079
    %v1125 = vpop.xlane.xlu0 %1124
    %1126 = vadd.xlane.f32.xlu0 %v1080
    %v1127 = vpop.xlane.xlu0 %1126
    %1128 = vadd.xlane.f32.xlu0 %v1081
    %v1129 = vpop.xlane.xlu0 %1128
    %vm1130 = vcmask 7168
    %v1131 = vsel %vm1130, %v1099, 0.0
    %v1132 = vsel %vm1130, %v1101, 0.0
    %v1133 = vadd.f32 %v1131, %v1132
    %v1134 = vsel %vm1130, %v1103, 0.0
    %v1135 = vadd.f32 %v1133, %v1134
    %v1136 = vsel %vm1130, %v1105, 0.0
    %v1137 = vadd.f32 %v1135, %v1136
    %v1138 = vsel %vm1130, %v1107, 0.0
    %v1139 = vadd.f32 %v1137, %v1138
    %v1140 = vsel %vm1130, %v1109, 0.0
    %v1141 = vadd.f32 %v1139, %v1140
    %v1142 = vsel %vm1130, %v1111, 0.0
    %v1143 = vadd.f32 %v1141, %v1142
    %v1144 = vsel %vm1130, %v1113, 0.0
    %v1145 = vadd.f32 %v1143, %v1144
    %v1146 = vsel %vm1130, %v1115, 0.0
    %v1147 = vadd.f32 %v1145, %v1146
    %v1148 = vsel %vm1130, %v1117, 0.0
    %v1149 = vadd.f32 %v1147, %v1148
    %v1150 = vsel %vm1130, %v1119, 0.0
    %v1151 = vadd.f32 %v1149, %v1150
    %v1152 = vsel %vm1130, %v1121, 0.0
    %v1153 = vadd.f32 %v1151, %v1152
    %v1154 = vsel %vm1130, %v1123, 0.0
    %v1155 = vadd.f32 %v1153, %v1154
    %v1156 = vsel %vm1130, %v1125, 0.0
    %v1157 = vadd.f32 %v1155, %v1156
    %v1158 = vsel %vm1130, %v1127, 0.0
    %v1159 = vadd.f32 %v1157, %v1158
    %v1160 = vsel %vm1130, %v1129, 0.0
    %v1161 = vadd.f32 %v1159, %v1160
    %1162 = vadd.xlane.f32.xlu0 %v1161
    %v1163 = vpop.xlane.xlu0 %1162
    %v1164 = vrot.slane %v1163, 4
    %v1165 = vadd.f32 %v1163, %v1164
    %v1166 = vrot.slane %v1165, 2
    %v1167 = vadd.f32 %v1165, %v1166
    %v1168 = vrot.slane %v1167, 1
    %v1169 = vadd.f32 %v1167, %v1168
    %s1170 = vtos %v1169
    %1171 = vadd.xlane.f32.xlu0 %v1082
    %v1172 = vpop.xlane.xlu0 %1171
    %1173 = vadd.xlane.f32.xlu0 %v1083
    %v1174 = vpop.xlane.xlu0 %1173
    %1175 = vadd.xlane.f32.xlu0 %v1084
    %v1176 = vpop.xlane.xlu0 %1175
    %1177 = vadd.xlane.f32.xlu0 %v1085
    %v1178 = vpop.xlane.xlu0 %1177
    %1179 = vadd.xlane.f32.xlu0 %v1086
    %v1180 = vpop.xlane.xlu0 %1179
    %1181 = vadd.xlane.f32.xlu0 %v1087
    %v1182 = vpop.xlane.xlu0 %1181
    %1183 = vadd.xlane.f32.xlu0 %v1088
    %v1184 = vpop.xlane.xlu0 %1183
    %1185 = vadd.xlane.f32.xlu0 %v1089
    %v1186 = vpop.xlane.xlu0 %1185
    %1187 = vadd.xlane.f32.xlu0 %v1090
    %v1188 = vpop.xlane.xlu0 %1187
    %1189 = vadd.xlane.f32.xlu0 %v1091
    %v1190 = vpop.xlane.xlu0 %1189
    %1191 = vadd.xlane.f32.xlu0 %v1092
    %v1192 = vpop.xlane.xlu0 %1191
    %1193 = vadd.xlane.f32.xlu0 %v1093
    %v1194 = vpop.xlane.xlu0 %1193
    %1195 = vadd.xlane.f32.xlu0 %v1094
    %v1196 = vpop.xlane.xlu0 %1195
    %1197 = vadd.xlane.f32.xlu0 %v1095
    %v1198 = vpop.xlane.xlu0 %1197
    %1199 = vadd.xlane.f32.xlu0 %v1096
    %v1200 = vpop.xlane.xlu0 %1199
    %1201 = vadd.xlane.f32.xlu0 %v1097
    %v1202 = vpop.xlane.xlu0 %1201
    %v1203 = vsel %vm1130, %v1172, 0.0
    %v1204 = vsel %vm1130, %v1174, 0.0
    %v1205 = vadd.f32 %v1203, %v1204
    %v1206 = vsel %vm1130, %v1176, 0.0
    %v1207 = vadd.f32 %v1205, %v1206
    %v1208 = vsel %vm1130, %v1178, 0.0
    %v1209 = vadd.f32 %v1207, %v1208
    %v1210 = vsel %vm1130, %v1180, 0.0
    %v1211 = vadd.f32 %v1209, %v1210
    %v1212 = vsel %vm1130, %v1182, 0.0
    %v1213 = vadd.f32 %v1211, %v1212
    %v1214 = vsel %vm1130, %v1184, 0.0
    %v1215 = vadd.f32 %v1213, %v1214
    %v1216 = vsel %vm1130, %v1186, 0.0
    %v1217 = vadd.f32 %v1215, %v1216
    %v1218 = vsel %vm1130, %v1188, 0.0
    %v1219 = vadd.f32 %v1217, %v1218
    %v1220 = vsel %vm1130, %v1190, 0.0
    %v1221 = vadd.f32 %v1219, %v1220
    %v1222 = vsel %vm1130, %v1192, 0.0
    %v1223 = vadd.f32 %v1221, %v1222
    %v1224 = vsel %vm1130, %v1194, 0.0
    %v1225 = vadd.f32 %v1223, %v1224
    %v1226 = vsel %vm1130, %v1196, 0.0
    %v1227 = vadd.f32 %v1225, %v1226
    %v1228 = vsel %vm1130, %v1198, 0.0
    %v1229 = vadd.f32 %v1227, %v1228
    %v1230 = vsel %vm1130, %v1200, 0.0
    %v1231 = vadd.f32 %v1229, %v1230
    %v1232 = vsel %vm1130, %v1202, 0.0
    %v1233 = vadd.f32 %v1231, %v1232
    %1234 = vadd.xlane.f32.xlu0 %v1233
    %v1235 = vpop.xlane.xlu0 %1234
    %v1236 = vrot.slane %v1235, 4
    %v1237 = vadd.f32 %v1235, %v1236
    %v1238 = vrot.slane %v1237, 2
    %v1239 = vadd.f32 %v1237, %v1238
    %v1240 = vrot.slane %v1239, 1
    %v1241 = vadd.f32 %v1239, %v1240
    %s1242 = vtos %v1241
    %vm1243 = vcmp.eq.s32.totalorder %v738, 0
    %v1244 = vstv %s1170
    %v1245 = vstv %s1242
    %v1246 = vsel %vm1243, %v1244, %v1245
    %1247 = vst [vmem:[#allocation5] sm:$0x3] %v1246
    // Predicated region
    $region26: #{tpu_custom_call.1} parent=1 // pred_check
      _
    $region27: #{tpu_custom_call.1} parent=1 // pred_check_branch
      %1249 = sbr.rel (0) target = $region29
    $region28: #{tpu_custom_call.1} parent=1 // pred_region
      %s1251 = ssub.s32 32, 32
      %1252 = vsyncadd [#allocation6], %s1251
      %s1254 = sshll.u32 [#allocation5], 4
      %s1255 = int_to_ptr.vmem [resolvable:$true] %s1254
      %1257 = dma.vmem_to_hbm [thread:$0]  %s1255, 32, %s8, [#allocation6]
    $region29: #{tpu_custom_call.1} parent=1 // pred_fallthru
      _
    // Predicated region
    $region30: #{tpu_custom_call.1} parent=1 // pred_check
      _
    $region31: #{tpu_custom_call.1} parent=1 // pred_check_branch
      %1259 = sbr.rel (0) target = $region33
    $region32: #{tpu_custom_call.1} parent=1 // pred_region
      %1260 = dma.done [#allocation6], 32
    $region33: #{tpu_custom_call.1} parent=1 // pred_fallthru
      _
    %1261 = vsyncpa [#allocation6], 1

</llo_original>
